<compile_context>
chip_gen: v7x
topology: tpu7x:2x2x1
jax: 0.10.0
libtpu: 0.0.40
codegen_flags: <defaults>
</compile_context>

<pallas_src>
import jax
import jax.numpy as jnp
from jax.experimental import pallas as pl
from jax.experimental.pallas import tpu as pltpu

_LANE = 128


def _round_up(x, m):
    return ((x + m - 1) // m) * m


def _plan_n(n, h, tile_n=None, max_tile_bytes=4 << 20):
    """Pick (padded_N, tile_N). Single full-extent tile when it comfortably
    fits VMEM (sized conservatively for v7x's 64 MiB / 32 MiB scoped budget,
    remembering BlockSpec double-buffers each input)."""
    if tile_n is None:
        rows_cap = max(_LANE, ((max_tile_bytes // (h * 4)) // _LANE) * _LANE)
        if n <= rows_cap:
            return n, n                       # one tile == full array dims
        tile_n = rows_cap
    else:
        if tile_n >= n:
            return n, n
        tile_n = _round_up(tile_n, _LANE)     # lane/sublane-aligned tiles
    return _round_up(n, tile_n), tile_n


def _factor_encoder_kernel(x_ref, r_ref, w1_ref, b1_ref, w2_ref, b2_ref,
                           out_ref, acc_ref):
    n = pl.program_id(1)

    @pl.when(n == 0)
    def _init():
        acc_ref[...] = jnp.zeros_like(acc_ref)

    # linear1: (tile_N, H) @ (H, P) + (1, P)  -> MXU, f32 accumulate
    logits = jnp.dot(x_ref[...], w1_ref[...],
                     preferred_element_type=jnp.float32) + b1_ref[...]

    # softmax over the portfolio axis (last/lane axis), per stock row
    m = jnp.max(logits, axis=-1, keepdims=True)
    e = jnp.exp(logits - m)
    inv = pl.reciprocal(jnp.sum(e, axis=-1, keepdims=True), approx=True)  # EUP
    weights = e * inv                                                    # (tile_N, P)

    # portfolio_return^T accumulated as a (1, P) row:
    #   (1, tile_N) @ (tile_N, P) keeps the N-reduction on the MXU.
    # Padded tail rows have returns == 0, so they contribute nothing.
    acc_ref[...] += jnp.dot(r_ref[...], weights,
                            preferred_element_type=jnp.float32)

    @pl.when(n == pl.num_programs(1) - 1)
    def _finalize():
        mean = jnp.dot(acc_ref[...], w2_ref[...],
                       preferred_element_type=jnp.float32) + b2_ref[...]  # (1, F)
        sigma = jnp.logaddexp(mean, 0.0)                                  # softplus
        out_ref[...] = jnp.concatenate([mean, sigma], axis=0)            # (2, F)


def factor_encoder_batched(stock_latent, returns, w1_t, b1, w2_t, b2,
                           *, tile_n=None, use_bf16=False):
    """stock_latent: (B, N, H); returns: (B, N).
    Returns (mean, sigma), each (B, F)."""
    B, N, H = stock_latent.shape
    assert returns.shape == (B, N)
    P = w1_t.shape[1]
    Fd = w2_t.shape[1]

    act_dt = jnp.bfloat16 if use_bf16 else jnp.float32
    x = stock_latent.astype(act_dt)
    w1 = w1_t.astype(act_dt)
    r = returns.astype(jnp.float32)

    n_pad, tn = _plan_n(N, H, tile_n)
    if n_pad != N:
        x = jnp.pad(x, ((0, 0), (0, n_pad - N), (0, 0)))
        r = jnp.pad(r, ((0, 0), (0, n_pad - N)))       # zero returns => no mass
    r = r[:, None, :]                                   # lane-dense (B, 1, N_pad)

    grid = (B, n_pad // tn)

    out = pl.pallas_call(
        _factor_encoder_kernel,
        out_shape=jax.ShapeDtypeStruct((B, 2, Fd), jnp.float32),
        grid=grid,
        in_specs=[
            pl.BlockSpec((None, tn, H), lambda b, n: (b, n, 0)),   # stock_latent
            pl.BlockSpec((None, 1, tn), lambda b, n: (b, 0, n)),   # returns row
            pl.BlockSpec((H, P), lambda b, n: (0, 0)),             # W1^T
            pl.BlockSpec((1, P), lambda b, n: (0, 0)),             # b1
            pl.BlockSpec((P, Fd), lambda b, n: (0, 0)),            # W2^T
            pl.BlockSpec((1, Fd), lambda b, n: (0, 0)),            # b2
        ],
        out_specs=pl.BlockSpec((None, 2, Fd), lambda b, n: (b, 0, 0)),
        scratch_shapes=[pltpu.VMEM((1, P), jnp.float32)],          # pr accumulator
        compiler_params=pltpu.CompilerParams(
            dimension_semantics=("parallel", "arbitrary")),
    )(x, r, w1,
      b1.reshape(1, -1).astype(jnp.float32),
      w2_t.astype(jnp.float32),
      b2.reshape(1, -1).astype(jnp.float32))

    return out[:, 0, :], out[:, 1, :]


def factor_encoder(stock_latent, returns, w1_t, b1, w2_t, b2, **kwargs):
    """Single-sample API matching the PyTorch module.
    stock_latent: (N, H); returns: (N,) or (N, 1). Returns (mean, sigma), each (F,)."""
    if returns.ndim == 2:
        returns = returns[:, 0]
    mean, sigma = factor_encoder_batched(stock_latent[None], returns[None],
                                         w1_t, b1, w2_t, b2, **kwargs)
    return mean[0], sigma[0]


def _reference(stock_latent, returns, w1_t, b1, w2_t, b2):
    if returns.ndim == 1:
        returns = returns[:, None]
    weights = jax.nn.softmax(stock_latent @ w1_t + b1, axis=1)
    pr = weights.T @ returns                      # (P, 1)
    mean = pr[:, 0] @ w2_t + b2                   # (F,)
    return mean, jax.nn.softplus(mean)


if __name__ == "__main__":
    # Shapes consistent with the module:
    #   N stocks = 64, hidden_dim = 32, num_portfolio = 16, factor_dims = 8
    N, H, P, Fd = 64, 32, 16, 8

    key = jax.random.PRNGKey(0)
    kx, kr, kw1, kb1, kw2, kb2, kbx, kbr = jax.random.split(key, 8)

    stock_latent = jax.random.normal(kx, (N, H), dtype=jnp.float32)
    returns = jax.random.normal(kr, (N,), dtype=jnp.float32)   # 1-D, like torch path

    # nn.Linear shapes: W1 (P, H), W2 (F, P); stored pre-transposed for the kernel.
    w1_t = jax.random.normal(kw1, (H, P), dtype=jnp.float32) * 0.1
    b1 = jax.random.normal(kb1, (P,), dtype=jnp.float32) * 0.1
    w2_t = jax.random.normal(kw2, (P, Fd), dtype=jnp.float32) * 0.1
    b2 = jax.random.normal(kb2, (Fd,), dtype=jnp.float32) * 0.1

    # 1) single sample (module-equivalent path)
    mean, sigma = factor_encoder(stock_latent, returns, w1_t, b1, w2_t, b2)
    jax.block_until_ready((mean, sigma))
    ref_mean, ref_sigma = _reference(stock_latent, returns, w1_t, b1, w2_t, b2)
    assert mean.shape == (Fd,) and sigma.shape == (Fd,)
    assert jnp.allclose(mean, ref_mean, atol=1e-3, rtol=1e-3)
    assert jnp.allclose(sigma, ref_sigma, atol=1e-3, rtol=1e-3)

    # 2) batched path: one pallas_call for B samples, "parallel" batch axis
    B = 4
    xb = jax.random.normal(kbx, (B, N, H), dtype=jnp.float32)
    rb = jax.random.normal(kbr, (B, N), dtype=jnp.float32)
    mb, sb = factor_encoder_batched(xb, rb, w1_t, b1, w2_t, b2)
    jax.block_until_ready((mb, sb))
    for i in range(B):
        rm, rs = _reference(xb[i], rb[i], w1_t, b1, w2_t, b2)
        assert jnp.allclose(mb[i], rm, atol=1e-3, rtol=1e-3)
        assert jnp.allclose(sb[i], rs, atol=1e-3, rtol=1e-3)

    # 3) multi-tile N path (exercises accumulator + zero-padding of the tail)
    N2 = 200
    x2 = jax.random.normal(kx, (N2, H), dtype=jnp.float32)
    r2 = jax.random.normal(kr, (N2,), dtype=jnp.float32)
    m2, s2 = factor_encoder(x2, r2, w1_t, b1, w2_t, b2, tile_n=128)
    jax.block_until_ready((m2, s2))
    rm2, rs2 = _reference(x2, r2, w1_t, b1, w2_t, b2)
    assert jnp.allclose(m2, rm2, atol=1e-3, rtol=1e-3)
    assert jnp.allclose(s2, rs2, atol=1e-3, rtol=1e-3)

    # 4) bf16 path for the N-scaling operands (loose tolerance; f32 accumulate)
    m3, s3 = factor_encoder(stock_latent, returns, w1_t, b1, w2_t, b2,
                            use_bf16=True)
    jax.block_until_ready((m3, s3))
    assert jnp.allclose(m3, ref_mean, atol=5e-2, rtol=5e-2)
    assert jnp.allclose(s3, ref_sigma, atol=5e-2, rtol=5e-2)

    print("KERNEL_OK")
</pallas_src>

<mosaic_0001>
module attributes {stable_mosaic.version = 11 : i64} {
  func.func @_factor_encoder_kernel(%arg0: i32, %arg1: i32, %arg2: memref<1x64x32xf32, #tpu.memory_space<vmem>>, %arg3: memref<1x1x64xf32, #tpu.memory_space<vmem>>, %arg4: memref<32x16xf32, #tpu.memory_space<vmem>>, %arg5: memref<1x16xf32, #tpu.memory_space<vmem>>, %arg6: memref<16x8xf32, #tpu.memory_space<vmem>>, %arg7: memref<1x8xf32, #tpu.memory_space<vmem>>, %arg8: memref<1x2x8xf32, #tpu.memory_space<vmem>>, %arg9: memref<1x16xf32, #tpu.memory_space<vmem>>) attributes {dimension_semantics = [#tpu.dimension_semantics<parallel>, #tpu.dimension_semantics<arbitrary>], iteration_bounds = array<i64: 1, 1>, scalar_prefetch = 0 : i64, scratch_operands = 1 : i64, tpu.core_type = #tpu.core_type<tc>, window_params = [{transform_indices = @transform_0, window_bounds = array<i64: 1, 64, 32>}, {transform_indices = @transform_1, window_bounds = array<i64: 1, 1, 64>}, {pipeline_mode = #tpu.pipeline_mode<synchronous>, transform_indices = @transform_2, window_bounds = array<i64: 32, 16>}, {pipeline_mode = #tpu.pipeline_mode<synchronous>, transform_indices = @transform_3, window_bounds = array<i64: 1, 16>}, {pipeline_mode = #tpu.pipeline_mode<synchronous>, transform_indices = @transform_4, window_bounds = array<i64: 16, 8>}, {pipeline_mode = #tpu.pipeline_mode<synchronous>, transform_indices = @transform_5, window_bounds = array<i64: 1, 8>}, {transform_indices = @transform_6, window_bounds = array<i64: 1, 2, 8>}]} {
    %c0_i32 = arith.constant 0 : i32
    %0 = arith.cmpi eq, %arg1, %c0_i32 : i32
    %1 = arith.extui %0 : i1 to i32
    %c0_i32_0 = arith.constant 0 : i32
    %2 = arith.cmpi ne, %1, %c0_i32_0 : i32
    scf.if %2 {
      %cst_19 = arith.constant 0.000000e+00 : f32
      %29 = vector.broadcast %cst_19 : f32 to vector<1x16xf32>
      %c0_20 = arith.constant 0 : index
      %c0_21 = arith.constant 0 : index
      %30 = vector.load %arg9[%c0_20, %c0_21] : memref<1x16xf32, #tpu.memory_space<vmem>>, vector<1x16xf32>
      tpu.vector_store %arg9[%c0_20, %c0_21], %29 {strides = array<i32>} : memref<1x16xf32, #tpu.memory_space<vmem>>, vector<1x16xf32>,
    } else {
    }
    %c0 = arith.constant 0 : index
    %c0_1 = arith.constant 0 : index
    %c0_2 = arith.constant 0 : index
    %3 = vector.load %arg2[%c0, %c0_1, %c0_2] : memref<1x64x32xf32, #tpu.memory_space<vmem>>, vector<1x64x32xf32>
    %4 = vector.shape_cast %3 : vector<1x64x32xf32> to vector<64x32xf32>
    %c0_3 = arith.constant 0 : index
    %c0_4 = arith.constant 0 : index
    %5 = vector.load %arg4[%c0_3, %c0_4] : memref<32x16xf32, #tpu.memory_space<vmem>>, vector<32x16xf32>
    %cst = arith.constant dense<0.000000e+00> : vector<64x16xf32>
    %6 = tpu.matmul %4, %5, %cst {dimension_numbers = #tpu.dot_dimension_numbers<[1], [0], [0], [1], [0, 0, 1, 1], [], []>} : vector<64x32xf32>, vector<32x16xf32>, vector<64x16xf32> -> vector<64x16xf32>
    %c0_5 = arith.constant 0 : index
    %c0_6 = arith.constant 0 : index
    %7 = vector.load %arg5[%c0_5, %c0_6] : memref<1x16xf32, #tpu.memory_space<vmem>>, vector<1x16xf32>
    %8 = vector.broadcast %7 : vector<1x16xf32> to vector<64x16xf32>
    %9 = arith.addf %6, %8 : vector<64x16xf32>
    %cst_7 = arith.constant dense<0xFF800000> : vector<64xf32>
    %10 = vector.multi_reduction <maximumf>, %9, %cst_7 [1] : vector<64x16xf32> to vector<64xf32>
    %11 = vector.shape_cast %10 : vector<64xf32> to vector<64x1xf32>
    %12 = vector.broadcast %11 : vector<64x1xf32> to vector<64x16xf32>
    %13 = arith.subf %9, %12 : vector<64x16xf32>
    %14 = math.exp %13 : vector<64x16xf32>
    %cst_8 = arith.constant dense<0.000000e+00> : vector<64xf32>
    %15 = vector.multi_reduction <add>, %14, %cst_8 [1] : vector<64x16xf32> to vector<64xf32>
    %16 = vector.shape_cast %15 : vector<64xf32> to vector<64x1xf32>
    %17 = tpu.reciprocal %16 {approx = true} : vector<64x1xf32> -> vector<64x1xf32>
    %18 = vector.broadcast %17 : vector<64x1xf32> to vector<64x16xf32>
    %19 = arith.mulf %14, %18 : vector<64x16xf32>
    %c0_9 = arith.constant 0 : index
    %c0_10 = arith.constant 0 : index
    %20 = vector.load %arg9[%c0_9, %c0_10] : memref<1x16xf32, #tpu.memory_space<vmem>>, vector<1x16xf32>
    %c0_11 = arith.constant 0 : index
    %c0_12 = arith.constant 0 : index
    %c0_13 = arith.constant 0 : index
    %21 = vector.load %arg3[%c0_11, %c0_12, %c0_13] : memref<1x1x64xf32, #tpu.memory_space<vmem>>, vector<1x1x64xf32>
    %22 = vector.shape_cast %21 : vector<1x1x64xf32> to vector<1x64xf32>
    %cst_14 = arith.constant dense<0.000000e+00> : vector<1x16xf32>
    %23 = tpu.matmul %22, %19, %cst_14 {dimension_numbers = #tpu.dot_dimension_numbers<[1], [0], [0], [1], [0, 0, 1, 1], [], []>} : vector<1x64xf32>, vector<64x16xf32>, vector<1x16xf32> -> vector<1x16xf32>
    %24 = arith.addf %20, %23 : vector<1x16xf32>
    %c0_15 = arith.constant 0 : index
    %c0_16 = arith.constant 0 : index
    %25 = vector.load %arg9[%c0_15, %c0_16] : memref<1x16xf32, #tpu.memory_space<vmem>>, vector<1x16xf32>
    tpu.vector_store %arg9[%c0_15, %c0_16], %24 {strides = array<i32>} : memref<1x16xf32, #tpu.memory_space<vmem>>, vector<1x16xf32>,
    %c0_i32_17 = arith.constant 0 : i32
    %26 = arith.cmpi eq, %arg1, %c0_i32_17 : i32
    %27 = arith.extui %26 : i1 to i32
    %c0_i32_18 = arith.constant 0 : i32
    %28 = arith.cmpi ne, %27, %c0_i32_18 : i32
    scf.if %28 {
      %c0_19 = arith.constant 0 : index
      %c0_20 = arith.constant 0 : index
      %29 = vector.load %arg9[%c0_19, %c0_20] : memref<1x16xf32, #tpu.memory_space<vmem>>, vector<1x16xf32>
      %c0_21 = arith.constant 0 : index
      %c0_22 = arith.constant 0 : index
      %30 = vector.load %arg6[%c0_21, %c0_22] : memref<16x8xf32, #tpu.memory_space<vmem>>, vector<16x8xf32>
      %cst_23 = arith.constant dense<0.000000e+00> : vector<1x8xf32>
      %31 = tpu.matmul %29, %30, %cst_23 {dimension_numbers = #tpu.dot_dimension_numbers<[1], [0], [0], [1], [0, 0, 1, 1], [], []>} : vector<1x16xf32>, vector<16x8xf32>, vector<1x8xf32> -> vector<1x8xf32>
      %c0_24 = arith.constant 0 : index
      %c0_25 = arith.constant 0 : index
      %32 = vector.load %arg7[%c0_24, %c0_25] : memref<1x8xf32, #tpu.memory_space<vmem>>, vector<1x8xf32>
      %33 = arith.addf %31, %32 : vector<1x8xf32>
      %cst_26 = arith.constant 0.000000e+00 : f32
      %34 = vector.broadcast %cst_26 : f32 to vector<1x8xf32>
      %35 = arith.maximumf %33, %34 : vector<1x8xf32>
      %36 = vector.broadcast %cst_26 : f32 to vector<1x8xf32>
      %37 = arith.subf %33, %36 : vector<1x8xf32>
      %38 = arith.cmpf one, %37, %37 : vector<1x8xf32>
      %39 = vector.broadcast %cst_26 : f32 to vector<1x8xf32>
      %40 = arith.addf %33, %39 : vector<1x8xf32>
      %41 = math.absf %37 : vector<1x8xf32>
      %cst_27 = arith.constant 0.000000e+00 : f32
      %42 = vector.broadcast %cst_27 : f32 to vector<1x8xf32>
      %43 = arith.subf %42, %41 : vector<1x8xf32>
      %44 = math.exp %43 : vector<1x8xf32>
      %45 = math.log1p %44 : vector<1x8xf32>
      %46 = arith.addf %35, %45 : vector<1x8xf32>
      %47 = arith.select %38, %40, %46 : vector<1x8xi1>, vector<1x8xf32>
      %48 = tpu.concatenate %33, %47 in 0 : vector<1x8xf32>, vector<1x8xf32> -> vector<2x8xf32>
      %c0_28 = arith.constant 0 : index
      %c0_29 = arith.constant 0 : index
      %c0_30 = arith.constant 0 : index
      %49 = vector.load %arg8[%c0_28, %c0_29, %c0_30] : memref<1x2x8xf32, #tpu.memory_space<vmem>>, vector<1x2x8xf32>
      %50 = vector.shape_cast %49 : vector<1x2x8xf32> to vector<2x8xf32>
      %51 = vector.shape_cast %48 : vector<2x8xf32> to vector<1x2x8xf32>
      tpu.vector_store %arg8[%c0_28, %c0_29, %c0_30], %51 {strides = array<i32>} : memref<1x2x8xf32, #tpu.memory_space<vmem>>, vector<1x2x8xf32>,
    } else {
    }
    return
  }
  func.func @transform_0(%arg0: i32, %arg1: i32) -> (i32, i32, i32) {
    %c0_i32 = arith.constant 0 : i32
    %c0_i32_0 = arith.constant 0 : i32
    return %arg0, %arg1, %c0_i32 : i32, i32, i32
  }
  func.func @transform_1(%arg0: i32, %arg1: i32) -> (i32, i32, i32) {
    %c0_i32 = arith.constant 0 : i32
    %c0_i32_0 = arith.constant 0 : i32
    return %arg0, %c0_i32, %arg1 : i32, i32, i32
  }
  func.func @transform_2(%arg0: i32, %arg1: i32) -> (i32, i32) {
    %c0_i32 = arith.constant 0 : i32
    %c0_i32_0 = arith.constant 0 : i32
    %c0_i32_1 = arith.constant 0 : i32
    return %c0_i32, %c0_i32_0 : i32, i32
  }
  func.func @transform_3(%arg0: i32, %arg1: i32) -> (i32, i32) {
    %c0_i32 = arith.constant 0 : i32
    %c0_i32_0 = arith.constant 0 : i32
    %c0_i32_1 = arith.constant 0 : i32
    return %c0_i32, %c0_i32_0 : i32, i32
  }
  func.func @transform_4(%arg0: i32, %arg1: i32) -> (i32, i32) {
    %c0_i32 = arith.constant 0 : i32
    %c0_i32_0 = arith.constant 0 : i32
    %c0_i32_1 = arith.constant 0 : i32
    return %c0_i32, %c0_i32_0 : i32, i32
  }
  func.func @transform_5(%arg0: i32, %arg1: i32) -> (i32, i32) {
    %c0_i32 = arith.constant 0 : i32
    %c0_i32_0 = arith.constant 0 : i32
    %c0_i32_1 = arith.constant 0 : i32
    return %c0_i32, %c0_i32_0 : i32, i32
  }
  func.func @transform_6(%arg0: i32, %arg1: i32) -> (i32, i32, i32) {
    %c0_i32 = arith.constant 0 : i32
    %c0_i32_0 = arith.constant 0 : i32
    %c0_i32_1 = arith.constant 0 : i32
    return %arg0, %c0_i32, %c0_i32_0 : i32, i32, i32
  }
}

</mosaic_0001>

<llo_original>
// kernel: tpu_custom_call.1
$region0: #{tpu_custom_call.1}
  #allocation0 [shape = 'u32[]', space=smem, size = 0x4, offset = 0x4, fixed_abs, tag = 'smem constant byte address 0x4 - core index']
  #allocation1 [shape = 'u32[144,128]{1,0:T(1,128)}', space=vmem, size = 0x12000, scoped, tag = 'internal scratch']
  #allocation2 [shape = 'f32[1,16]{1,0:T(1,128)}', space=vmem, size = 0x200, scoped, tag = 'scratch operand']
  %s0 = inlined_call_operand.vmem [shape: f32[1,64,32], index: 0, kind: input, shape index: {}]
  %s1 = inlined_call_operand.vmem [shape: f32[1,1,64], index: 1, kind: input, shape index: {}]
  %s2 = inlined_call_operand.vmem [shape: f32[32,16], index: 2, kind: input, shape index: {}]
  %s3 = inlined_call_operand.vmem [shape: f32[1,16], index: 3, kind: input, shape index: {}]
  %s4 = inlined_call_operand.vmem [shape: f32[16,8], index: 4, kind: input, shape index: {}]
  %s5 = inlined_call_operand.vmem [shape: f32[1,8], index: 5, kind: input, shape index: {}]
  %s6 = inlined_call_operand.hbm [shape: f32[1,2,8], index: 6, kind: output, shape index: {}]
  %s7 = sld [smem:[#allocation0]]
  $region42: #{tpu_custom_call.1} parent=0
    _
  %s9 = ssub.s32 1, %s7
  %s10 = scalar_select 0, %s9, %s7
  $region1: #{tpu_custom_call.1} parent=0
    #allocation3 [shape = 'u8[1024]{0}', space=vmem, size = 0x400, scoped, tag = 'output window, operand 0, single buffered']
    #allocation4 [shape = 's32[1]{0}', space=sflag, size = 0x4, scoped, tag = 'scoped memory for tpu_custom_call.1']
    %11 = vsyncpa [#allocation4], 0
    // Predicated region
    $region2: #{tpu_custom_call.1} parent=1 // pred_check
      _
    $region3: #{tpu_custom_call.1} parent=1 // pred_check_branch
      %13 = sbr.rel (0) target = $region5
    $region4: #{tpu_custom_call.1} parent=1 // pred_region
      _
    $region5: #{tpu_custom_call.1} parent=1 // pred_fallthru
      _
    // Predicated region
    $region6: #{tpu_custom_call.1} parent=1 // pred_check
      _
    $region7: #{tpu_custom_call.1} parent=1 // pred_check_branch
      %15 = sbr.rel (0) target = $region9
    $region8: #{tpu_custom_call.1} parent=1 // pred_region
      _
    $region9: #{tpu_custom_call.1} parent=1 // pred_fallthru
      _
    // Predicated region
    $region10: #{tpu_custom_call.1} parent=1 // pred_check
      _
    $region11: #{tpu_custom_call.1} parent=1 // pred_check_branch
      %17 = sbr.rel (0) target = $region13
    $region12: #{tpu_custom_call.1} parent=1 // pred_region
      _
    $region13: #{tpu_custom_call.1} parent=1 // pred_fallthru
      _
    // Predicated region
    $region14: #{tpu_custom_call.1} parent=1 // pred_check
      _
    $region15: #{tpu_custom_call.1} parent=1 // pred_check_branch
      %19 = sbr.rel (0) target = $region17
    $region16: #{tpu_custom_call.1} parent=1 // pred_region
      _
    $region17: #{tpu_custom_call.1} parent=1 // pred_fallthru
      _
    // Predicated region
    $region18: #{tpu_custom_call.1} parent=1 // pred_check
      _
    $region19: #{tpu_custom_call.1} parent=1 // pred_check_branch
      %21 = sbr.rel (0) target = $region21
    $region20: #{tpu_custom_call.1} parent=1 // pred_region
      _
    $region21: #{tpu_custom_call.1} parent=1 // pred_fallthru
      _
    // Predicated region
    $region22: #{tpu_custom_call.1} parent=1 // pred_check
      _
    $region23: #{tpu_custom_call.1} parent=1 // pred_check_branch
      %23 = sbr.rel (0) target = $region25
    $region24: #{tpu_custom_call.1} parent=1 // pred_region
      _
    $region25: #{tpu_custom_call.1} parent=1 // pred_fallthru
      _
    %p24 = scmp.eq.s32.totalorder 0, 0
    // Predicated region
    $region26: #{tpu_custom_call.1} parent=1 // pred_check
      %p25 = pneg %p24
    $region27: #{tpu_custom_call.1} parent=1 // pred_check_branch
      %27 = sbr.rel (%p25) target = $region29
    $region28: #{tpu_custom_call.1} parent=1 // pred_region
      %vm28 = vcmask 122880
      %29 = vst.msk [vmem:[#allocation2] sm:$0x1] %vm28, 0.0
    $region29: #{tpu_custom_call.1} parent=1 // pred_fallthru
      _
    %v30 = vld [vmem:[%s0] sm:$0xff]
    %v31 = vld [vmem:[%s0 + $0x8] sm:$0xff]
    %v32 = vld [vmem:[%s0 + $0x10] sm:$0xff]
    %v33 = vld [vmem:[%s0 + $0x18] sm:$0xff]
    %v34 = vld [vmem:[%s0 + $0x20] sm:$0xff]
    %v35 = vld [vmem:[%s0 + $0x28] sm:$0xff]
    %v36 = vld [vmem:[%s0 + $0x30] sm:$0xff]
    %v37 = vld [vmem:[%s0 + $0x38] sm:$0xff]
    %v38 = vld [vmem:[%s2] sm:$0xff]
    %v39 = vld [vmem:[%s2 + $0x8] sm:$0xff]
    %v40 = vld [vmem:[%s2 + $0x10] sm:$0xff]
    %v41 = vld [vmem:[%s2 + $0x18] sm:$0xff]
    %v42 = vld [vmem:[%s3] sm:$0x1]
    %v44 = vlaneseq
    %v45 = vshrl.u32 %v44, 7
    %v46 = vsub.s32 0, %v45
    %v47 = vrot.slane %v42, %v46
    %vm49 = vcmask 261120
    %v51 = vsel %vm49, %v30, 0
    %v54 = vsel %vm49, %v31, 0
    %v57 = vsel %vm49, %v32, 0
    %v60 = vsel %vm49, %v33, 0
    %v63 = vsel %vm49, %v34, 0
    %v66 = vsel %vm49, %v35, 0
    %v69 = vsel %vm49, %v36, 0
    %v72 = vsel %vm49, %v37, 0
    %74 = vmatprep.subr.mxu0 0.0
    %75 = vmatpush1.msra.mxu0 %v38
    %76 = vmatprep.subr.mxu0 0.0
    %77 = vmatpush1.msra.mxu0 %v39
    %78 = vmatprep.subr.mxu0 0.0
    %79 = vmatpush1.msra.mxu0 %v40
    %80 = vmatprep.subr.mxu0 0.0
    %81 = vmatpush1.msra.mxu0 %v41
    %82 = vmatprep.subr.mxu0 0.0
    %83 = vmatpush1.msra.mxu0 0.0
    %84 = vmatprep.subr.mxu0 0.0
    %85 = vmatpush1.msra.mxu0 0.0
    %86 = vmatprep.subr.mxu0 0.0
    %87 = vmatpush1.msra.mxu0 0.0
    %88 = vmatprep.subr.mxu0 0.0
    %89 = vmatpush1.msra.mxu0 0.0
    %90 = vmatprep.subr.mxu0 0.0
    %91 = vmatpush1.msra.mxu0 0.0
    %92 = vmatprep.subr.mxu0 0.0
    %93 = vmatpush1.msra.mxu0 0.0
    %94 = vmatprep.subr.mxu0 0.0
    %95 = vmatpush1.msra.mxu0 0.0
    %96 = vmatprep.subr.mxu0 0.0
    %97 = vmatpush1.msra.mxu0 0.0
    %98 = vmatprep.subr.mxu0 0.0
    %99 = vmatpush1.msra.mxu0 0.0
    %100 = vmatprep.subr.mxu0 0.0
    %101 = vmatpush1.msra.mxu0 0.0
    %102 = vmatprep.subr.mxu0 0.0
    %103 = vmatpush1.msra.mxu0 0.0
    %104 = vmatprep.subr.mxu0 0.0
    %105 = vmatpush1.msra.mxu0 0.0
    %106 = vmatprep.subr.mxu0 0.0
    %107 = vmatpush1.msra.mxu0 0.0
    %108 = vmatprep.subr.mxu0 0.0
    %109 = vmatpush1.msra.mxu0 0.0
    %110 = vmatprep.subr.mxu0 0.0
    %111 = vmatpush1.msra.mxu0 0.0
    %112 = vmatprep.subr.mxu0 0.0
    %113 = vmatpush1.msra.mxu0 0.0
    %114 = vmatprep.subr.mxu0 0.0
    %115 = vmatpush1.msra.mxu0 0.0
    %116 = vmatprep.subr.mxu0 0.0
    %117 = vmatpush1.msra.mxu0 0.0
    %118 = vmatprep.subr.mxu0 0.0
    %119 = vmatpush1.msra.mxu0 0.0
    %120 = vmatprep.subr.mxu0 0.0
    %121 = vmatpush1.msra.mxu0 0.0
    %122 = vmatprep.subr.mxu0 0.0
    %123 = vmatpush1.msra.mxu0 0.0
    %124 = vmatprep.subr.mxu0 0.0
    %125 = vmatpush1.msra.mxu0 0.0
    %126 = vmatprep.subr.mxu0 0.0
    %127 = vmatpush1.msra.mxu0 0.0
    %128 = vmatprep.subr.mxu0 0.0
    %129 = vmatpush1.msra.mxu0 0.0
    %130 = vmatprep.subr.mxu0 0.0
    %131 = vmatpush1.msra.mxu0 0.0
    %132 = vmatprep.subr.mxu0 0.0
    %133 = vmatpush1.msra.mxu0 0.0
    %134 = vmatprep.subr.mxu0 0.0
    %135 = vmatpush1.msra.mxu0 0.0
    %136 = vmatprep.subr.mxu0 0.0
    %137 = vmatpush1.msra.mxu0 0.0
    %138 = vmatprep.mubr.f32.mxu0 0.0
    %139 = vmatmul.mubr.f32.gmra.mrb[0].mxu0 %v51
    %v140 = vpop.f32.mrb[0].mxu0
    %v141 = vadd.f32 %v47, %v140
    %v142 = vpop.f32.mrb[0].mxu0
    %143 = vmatprep.mubr.f32.mxu0 0.0
    %144 = vmatmul.mubr.f32.gmra.mrb[0].mxu0 %v54
    %v145 = vpop.f32.mrb[0].mxu0
    %v146 = vadd.f32 %v47, %v145
    %v147 = vpop.f32.mrb[0].mxu0
    %148 = vmatprep.mubr.f32.mxu0 0.0
    %149 = vmatmul.mubr.f32.gmra.mrb[0].mxu0 %v57
    %v150 = vpop.f32.mrb[0].mxu0
    %v151 = vadd.f32 %v47, %v150
    %v152 = vpop.f32.mrb[0].mxu0
    %153 = vmatprep.mubr.f32.mxu0 0.0
    %154 = vmatmul.mubr.f32.gmra.mrb[0].mxu0 %v60
    %v155 = vpop.f32.mrb[0].mxu0
    %v156 = vadd.f32 %v47, %v155
    %v157 = vpop.f32.mrb[0].mxu0
    %158 = vmatprep.mubr.f32.mxu0 0.0
    %159 = vmatmul.mubr.f32.gmra.mrb[0].mxu0 %v63
    %v160 = vpop.f32.mrb[0].mxu0
    %v161 = vadd.f32 %v47, %v160
    %v162 = vpop.f32.mrb[0].mxu0
    %163 = vmatprep.mubr.f32.mxu0 0.0
    %164 = vmatmul.mubr.f32.gmra.mrb[0].mxu0 %v66
    %v165 = vpop.f32.mrb[0].mxu0
    %v166 = vadd.f32 %v47, %v165
    %v167 = vpop.f32.mrb[0].mxu0
    %168 = vmatprep.mubr.f32.mxu0 0.0
    %169 = vmatmul.mubr.f32.gmra.mrb[0].mxu0 %v69
    %v170 = vpop.f32.mrb[0].mxu0
    %v171 = vadd.f32 %v47, %v170
    %v172 = vpop.f32.mrb[0].mxu0
    %173 = vmatprep.mubr.f32.mxu0 0.0
    %174 = vmatmul.mubr.f32.gmra.mrb[0].mxu0 %v72
    %v175 = vpop.f32.mrb[0].mxu0
    %v176 = vadd.f32 %v47, %v175
    %v177 = vpop.f32.mrb[0].mxu0
    %178 = vdwg.mxu0
    %vm179 = vcmask 130048
    %v180 = vsel %vm179, %v141, -inf
    %181 = vmax.xlane.f32.xlu0 %v180
    %v182 = vpop.xlane.xlu0 %181
    %v183 = vsel %vm179, %v146, -inf
    %184 = vmax.xlane.f32.xlu0 %v183
    %v185 = vpop.xlane.xlu0 %184
    %v186 = vsel %vm179, %v151, -inf
    %187 = vmax.xlane.f32.xlu0 %v186
    %v188 = vpop.xlane.xlu0 %187
    %v189 = vsel %vm179, %v156, -inf
    %190 = vmax.xlane.f32.xlu0 %v189
    %v191 = vpop.xlane.xlu0 %190
    %v192 = vsel %vm179, %v161, -inf
    %193 = vmax.xlane.f32.xlu0 %v192
    %v194 = vpop.xlane.xlu0 %193
    %v195 = vsel %vm179, %v166, -inf
    %196 = vmax.xlane.f32.xlu0 %v195
    %v197 = vpop.xlane.xlu0 %196
    %v198 = vsel %vm179, %v171, -inf
    %199 = vmax.xlane.f32.xlu0 %v198
    %v200 = vpop.xlane.xlu0 %199
    %v201 = vsel %vm179, %v176, -inf
    %202 = vmax.xlane.f32.xlu0 %v201
    %v203 = vpop.xlane.xlu0 %202
    %v204 = vsub.f32 %v141, %v182
    %v205 = vsub.f32 %v146, %v185
    %v206 = vsub.f32 %v151, %v188
    %v207 = vsub.f32 %v156, %v191
    %v208 = vsub.f32 %v161, %v194
    %v209 = vsub.f32 %v166, %v197
    %v210 = vsub.f32 %v171, %v200
    %v211 = vsub.f32 %v176, %v203
    %v212 = vmul.f32 %v204, 1.442695
    %v213 = vpow.pop %v212
    %v214 = vmul.f32 %v205, 1.442695
    %v215 = vpow.pop %v214
    %v216 = vmul.f32 %v206, 1.442695
    %v217 = vpow.pop %v216
    %v218 = vmul.f32 %v207, 1.442695
    %v219 = vpow.pop %v218
    %v220 = vmul.f32 %v208, 1.442695
    %v221 = vpow.pop %v220
    %v222 = vmul.f32 %v209, 1.442695
    %v223 = vpow.pop %v222
    %v224 = vmul.f32 %v210, 1.442695
    %v225 = vpow.pop %v224
    %v226 = vmul.f32 %v211, 1.442695
    %v227 = vpow.pop %v226
    %v228 = vsel %vm179, %v213, 0.0
    %229 = vadd.xlane.f32.xlu0 %v228
    %v230 = vpop.xlane.xlu0 %229
    %v231 = vsel %vm179, %v215, 0.0
    %232 = vadd.xlane.f32.xlu0 %v231
    %v233 = vpop.xlane.xlu0 %232
    %v234 = vsel %vm179, %v217, 0.0
    %235 = vadd.xlane.f32.xlu0 %v234
    %v236 = vpop.xlane.xlu0 %235
    %v237 = vsel %vm179, %v219, 0.0
    %238 = vadd.xlane.f32.xlu0 %v237
    %v239 = vpop.xlane.xlu0 %238
    %v240 = vsel %vm179, %v221, 0.0
    %241 = vadd.xlane.f32.xlu0 %v240
    %v242 = vpop.xlane.xlu0 %241
    %v243 = vsel %vm179, %v223, 0.0
    %244 = vadd.xlane.f32.xlu0 %v243
    %v245 = vpop.xlane.xlu0 %244
    %v246 = vsel %vm179, %v225, 0.0
    %247 = vadd.xlane.f32.xlu0 %v246
    %v248 = vpop.xlane.xlu0 %247
    %v249 = vsel %vm179, %v227, 0.0
    %250 = vadd.xlane.f32.xlu0 %v249
    %v251 = vpop.xlane.xlu0 %250
    %v252 = vrcp.pop %v230
    %v253 = vrcp.pop %v233
    %v254 = vrcp.pop %v236
    %v255 = vrcp.pop %v239
    %v256 = vrcp.pop %v242
    %v257 = vrcp.pop %v245
    %v258 = vrcp.pop %v248
    %v259 = vrcp.pop %v251
    %v260 = vmul.f32 %v213, %v252
    %v261 = vmul.f32 %v215, %v253
    %v262 = vmul.f32 %v217, %v254
    %v263 = vmul.f32 %v219, %v255
    %v264 = vmul.f32 %v221, %v256
    %v265 = vmul.f32 %v223, %v257
    %v266 = vmul.f32 %v225, %v258
    %v267 = vmul.f32 %v227, %v259
    %v268 = vld [vmem:[#allocation2] sm:$0x1]
    %v269 = vld [vmem:[%s1] sm:$0x1]
    %vm270 = vcmask 523264
    %v272 = vsel %vm270, %v269, 0
    %274 = vmatprep.subr.mxu0 0.0
    %275 = vmatpush1.msra.mxu0 %v260
    %276 = vmatprep.subr.mxu0 0.0
    %277 = vmatpush1.msra.mxu0 %v261
    %278 = vmatprep.subr.mxu0 0.0
    %279 = vmatpush1.msra.mxu0 %v262
    %280 = vmatprep.subr.mxu0 0.0
    %281 = vmatpush1.msra.mxu0 %v263
    %282 = vmatprep.subr.mxu0 0.0
    %283 = vmatpush1.msra.mxu0 %v264
    %284 = vmatprep.subr.mxu0 0.0
    %285 = vmatpush1.msra.mxu0 %v265
    %286 = vmatprep.subr.mxu0 0.0
    %287 = vmatpush1.msra.mxu0 %v266
    %288 = vmatprep.subr.mxu0 0.0
    %289 = vmatpush1.msra.mxu0 %v267
    %290 = vmatprep.subr.mxu0 0.0
    %291 = vmatpush1.msra.mxu0 0.0
    %292 = vmatprep.subr.mxu0 0.0
    %293 = vmatpush1.msra.mxu0 0.0
    %294 = vmatprep.subr.mxu0 0.0
    %295 = vmatpush1.msra.mxu0 0.0
    %296 = vmatprep.subr.mxu0 0.0
    %297 = vmatpush1.msra.mxu0 0.0
    %298 = vmatprep.subr.mxu0 0.0
    %299 = vmatpush1.msra.mxu0 0.0
    %300 = vmatprep.subr.mxu0 0.0
    %301 = vmatpush1.msra.mxu0 0.0
    %302 = vmatprep.subr.mxu0 0.0
    %303 = vmatpush1.msra.mxu0 0.0
    %304 = vmatprep.subr.mxu0 0.0
    %305 = vmatpush1.msra.mxu0 0.0
    %306 = vmatprep.subr.mxu0 0.0
    %307 = vmatpush1.msra.mxu0 0.0
    %308 = vmatprep.subr.mxu0 0.0
    %309 = vmatpush1.msra.mxu0 0.0
    %310 = vmatprep.subr.mxu0 0.0
    %311 = vmatpush1.msra.mxu0 0.0
    %312 = vmatprep.subr.mxu0 0.0
    %313 = vmatpush1.msra.mxu0 0.0
    %314 = vmatprep.subr.mxu0 0.0
    %315 = vmatpush1.msra.mxu0 0.0
    %316 = vmatprep.subr.mxu0 0.0
    %317 = vmatpush1.msra.mxu0 0.0
    %318 = vmatprep.subr.mxu0 0.0
    %319 = vmatpush1.msra.mxu0 0.0
    %320 = vmatprep.subr.mxu0 0.0
    %321 = vmatpush1.msra.mxu0 0.0
    %322 = vmatprep.subr.mxu0 0.0
    %323 = vmatpush1.msra.mxu0 0.0
    %324 = vmatprep.subr.mxu0 0.0
    %325 = vmatpush1.msra.mxu0 0.0
    %326 = vmatprep.subr.mxu0 0.0
    %327 = vmatpush1.msra.mxu0 0.0
    %328 = vmatprep.subr.mxu0 0.0
    %329 = vmatpush1.msra.mxu0 0.0
    %330 = vmatprep.subr.mxu0 0.0
    %331 = vmatpush1.msra.mxu0 0.0
    %332 = vmatprep.subr.mxu0 0.0
    %333 = vmatpush1.msra.mxu0 0.0
    %334 = vmatprep.subr.mxu0 0.0
    %335 = vmatpush1.msra.mxu0 0.0
    %336 = vmatprep.subr.mxu0 0.0
    %337 = vmatpush1.msra.mxu0 0.0
    %338 = vmatprep.mubr.f32.mxu0 0.0
    %339 = vmatmul.mubr.f32.gmra.mrb[0].mxu0 %v272
    %v340 = vpop.f32.mrb[0].mxu0
    %v341 = vadd.f32 0.0, %v340
    %v342 = vpop.f32.mrb[0].mxu0
    %343 = vdwg.mxu0
    %v344 = vadd.f32 %v268, %v341
    %vm345 = vcmask 122880
    %346 = vst.msk [vmem:[#allocation2] sm:$0x1] %vm345, %v344
    // Predicated region
    $region30: #{tpu_custom_call.1} parent=1 // pred_check
      %p347 = pneg %p24
    $region31: #{tpu_custom_call.1} parent=1 // pred_check_branch
      %349 = sbr.rel (%p347) target = $region33
    $region32: #{tpu_custom_call.1} parent=1 // pred_region
      %v350 = vld [vmem:[#allocation2] sm:$0x1]
      %v351 = vld [vmem:[%s4] sm:$0xff]
      %v352 = vld [vmem:[%s4 + $0x8] sm:$0xff]
      %v353 = vld [vmem:[%s5] sm:$0x1]
      %v355 = vsel %vm179, %v350, 0
      %357 = vmatprep.subr.mxu0 0.0
      %358 = vmatpush1.msra.mxu0 %v351
      %359 = vmatprep.subr.mxu0 0.0
      %360 = vmatpush1.msra.mxu0 %v352
      %361 = vmatprep.subr.mxu0 0.0
      %362 = vmatpush1.msra.mxu0 0.0
      %363 = vmatprep.subr.mxu0 0.0
      %364 = vmatpush1.msra.mxu0 0.0
      %365 = vmatprep.subr.mxu0 0.0
      %366 = vmatpush1.msra.mxu0 0.0
      %367 = vmatprep.subr.mxu0 0.0
      %368 = vmatpush1.msra.mxu0 0.0
      %369 = vmatprep.subr.mxu0 0.0
      %370 = vmatpush1.msra.mxu0 0.0
      %371 = vmatprep.subr.mxu0 0.0
      %372 = vmatpush1.msra.mxu0 0.0
      %373 = vmatprep.subr.mxu0 0.0
      %374 = vmatpush1.msra.mxu0 0.0
      %375 = vmatprep.subr.mxu0 0.0
      %376 = vmatpush1.msra.mxu0 0.0
      %377 = vmatprep.subr.mxu0 0.0
      %378 = vmatpush1.msra.mxu0 0.0
      %379 = vmatprep.subr.mxu0 0.0
      %380 = vmatpush1.msra.mxu0 0.0
      %381 = vmatprep.subr.mxu0 0.0
      %382 = vmatpush1.msra.mxu0 0.0
      %383 = vmatprep.subr.mxu0 0.0
      %384 = vmatpush1.msra.mxu0 0.0
      %385 = vmatprep.subr.mxu0 0.0
      %386 = vmatpush1.msra.mxu0 0.0
      %387 = vmatprep.subr.mxu0 0.0
      %388 = vmatpush1.msra.mxu0 0.0
      %389 = vmatprep.subr.mxu0 0.0
      %390 = vmatpush1.msra.mxu0 0.0
      %391 = vmatprep.subr.mxu0 0.0
      %392 = vmatpush1.msra.mxu0 0.0
      %393 = vmatprep.subr.mxu0 0.0
      %394 = vmatpush1.msra.mxu0 0.0
      %395 = vmatprep.subr.mxu0 0.0
      %396 = vmatpush1.msra.mxu0 0.0
      %397 = vmatprep.subr.mxu0 0.0
      %398 = vmatpush1.msra.mxu0 0.0
      %399 = vmatprep.subr.mxu0 0.0
      %400 = vmatpush1.msra.mxu0 0.0
      %401 = vmatprep.subr.mxu0 0.0
      %402 = vmatpush1.msra.mxu0 0.0
      %403 = vmatprep.subr.mxu0 0.0
      %404 = vmatpush1.msra.mxu0 0.0
      %405 = vmatprep.subr.mxu0 0.0
      %406 = vmatpush1.msra.mxu0 0.0
      %407 = vmatprep.subr.mxu0 0.0
      %408 = vmatpush1.msra.mxu0 0.0
      %409 = vmatprep.subr.mxu0 0.0
      %410 = vmatpush1.msra.mxu0 0.0
      %411 = vmatprep.subr.mxu0 0.0
      %412 = vmatpush1.msra.mxu0 0.0
      %413 = vmatprep.subr.mxu0 0.0
      %414 = vmatpush1.msra.mxu0 0.0
      %415 = vmatprep.subr.mxu0 0.0
      %416 = vmatpush1.msra.mxu0 0.0
      %417 = vmatprep.subr.mxu0 0.0
      %418 = vmatpush1.msra.mxu0 0.0
      %419 = vmatprep.subr.mxu0 0.0
      %420 = vmatpush1.msra.mxu0 0.0
      %421 = vmatprep.mubr.f32.mxu0 0.0
      %422 = vmatmul.mubr.f32.gmra.mrb[0].mxu0 %v355
      %v423 = vpop.f32.mrb[0].mxu0
      %v424 = vadd.f32 %v353, %v423
      %v425 = vpop.f32.mrb[0].mxu0
      %426 = vdwg.mxu0
      %v427 = vmax.f32 %v424, 0.0
      %vm428 = vcmp.ne.f32.partialorder %v424, %v424
      %v429 = vadd.f32 %v424, 0.0
      %v430 = vand.u32 2147483647, %v424
      %v431 = vsub.f32 0.0, %v430
      %v432 = vmul.f32 %v431, 1.442695
      %v433 = vpow.pop %v432
      %v434 = vadd.f32 %v433, 1.0
      %v435 = vlog2.pop %v434
      %v436 = vmul.f32 %v435, 0.6931472
      %v437 = vmul.f32 -0.5, %v433
      %v438 = vadd.f32 %v437, 1.0
      %v439 = vmul.f32 %v438, %v433
      %v440 = vand.u32 2147483647, %v433
      %vm441 = vcmp.lt.f32.partialorder %v440, 0.0004427343
      %v442 = vsel %vm441, %v439, %v436
      %v443 = vadd.f32 %v427, %v442
      %v444 = vsel %vm428, %v429, %v443
      %v446 = vrot.slane %v444, 7
      %vm448 = vcmask 1040384
      %v449 = vsel %vm448, %v424, %v446
      %vm450 = vcmask 58368
      %451 = vst.msk [vmem:[#allocation3] sm:$0x3] %vm450, %v449
    $region33: #{tpu_custom_call.1} parent=1 // pred_fallthru
      _
    // Predicated region
    $region34: #{tpu_custom_call.1} parent=1 // pred_check
      _
    $region35: #{tpu_custom_call.1} parent=1 // pred_check_branch
      %453 = sbr.rel (0) target = $region37
    $region36: #{tpu_custom_call.1} parent=1 // pred_region
      %s455 = ssub.s32 32, 32
      %456 = vsyncadd [#allocation4], %s455
      %s458 = sshll.u32 [#allocation3], 4
      %s459 = int_to_ptr.vmem [resolvable:$true] %s458
      %461 = dma.vmem_to_hbm [thread:$0]  %s459, 32, %s6, [#allocation4]
    $region37: #{tpu_custom_call.1} parent=1 // pred_fallthru
      _
    // Predicated region
    $region38: #{tpu_custom_call.1} parent=1 // pred_check
      _
    $region39: #{tpu_custom_call.1} parent=1 // pred_check_branch
      %463 = sbr.rel (0) target = $region41
    $region40: #{tpu_custom_call.1} parent=1 // pred_region
      %464 = dma.done [#allocation4], 32
    $region41: #{tpu_custom_call.1} parent=1 // pred_fallthru
      _
    %465 = vsyncpa [#allocation4], 1

</llo_original>
